<compile_context>
chip_gen: v7x
topology: tpu7x:2x2x1
jax: 0.10.0
libtpu: 0.0.40
codegen_flags: <defaults>
</compile_context>

<pallas_src>
import functools

import jax
import jax.numpy as jnp
import numpy as np
from jax import lax
from jax.experimental import pallas as pl
from jax.experimental.pallas import tpu as pltpu


def _round_down(n, m):
    return (n // m) * m


def _device_kind():
    try:
        return jax.devices()[0].device_kind.lower()
    except Exception:
        return ""


def _is_v7(kind):
    return ("v7" in kind) or ("tpu7" in kind)


def _dim_semantics(kind, hw_axis):
    """(bc_axis, hw_axis) semantics. bc axis is core-parallel on v7x only."""
    if _is_v7(kind) and all(
            hasattr(pltpu, n) for n in ("CORE_PARALLEL", "PARALLEL", "ARBITRARY")):
        hw_enum = pltpu.ARBITRARY if hw_axis == "arbitrary" else pltpu.PARALLEL
        return (pltpu.CORE_PARALLEL, hw_enum)
    return ("parallel", hw_axis)


def _pick_tiles(bc, hw, itemsize, block_budget_bytes):
    """Byte-budgeted (bc_tile, hw_tile).

    hw (lane) axis: full row when it fits the budget, else a multiple of 128
    (partial last block, masked in the stats kernel).  bc (sublane) axis:
    multiple of the dtype's sublane packing (8/16/32 for 4/2/1-byte dtypes),
    or the full B*C extent.
    """
    sub = {4: 8, 2: 16, 1: 32}.get(itemsize, 8)
    row_bytes = hw * itemsize
    if sub * row_bytes <= block_budget_bytes:
        hw_tile = hw
        bc_tile = max(sub, _round_down(block_budget_bytes // row_bytes, sub))
        if bc_tile >= bc:
            bc_tile = bc                      # full extent: no alignment needed
    else:
        bc_tile = min(bc, sub)
        hw_tile = max(128, _round_down(block_budget_bytes // (bc_tile * itemsize), 128))
        if hw_tile >= hw:
            hw_tile = hw
    return bc_tile, hw_tile


# ----------------------------------------------------------------------------
# Kernel 1: per-row (B*C) [sum, sumsq], reduced over HW tiles.
# ----------------------------------------------------------------------------
def _stats_kernel(x_ref, stats_ref, *, hw, hw_tile):
    # x_ref: (bc_tile, hw_tile); stats_ref: (bc_tile, 2) resident accumulator
    # (col 0 = sum, col 1 = sum of squares), written back once per bc block.
    j = pl.program_id(1)

    @pl.when(j == 0)
    def _():
        stats_ref[...] = jnp.zeros_like(stats_ref)

    x = x_ref[...].astype(jnp.float32)
    if hw % hw_tile != 0:
        # Partial last HW tile: out-of-bounds lanes hold undefined data.
        col = lax.broadcasted_iota(jnp.int32, x.shape, 1) + j * hw_tile
        x = jnp.where(col < hw, x, 0.0)
    stats_ref[:, 0:1] += jnp.sum(x, axis=1, keepdims=True)
    stats_ref[:, 1:2] += jnp.sum(x * x, axis=1, keepdims=True)


# ----------------------------------------------------------------------------
# Kernel 2: streaming fused apply  out = x * scale + bias  (per-row scale/bias)
# ----------------------------------------------------------------------------
def _apply_kernel(scale_ref, bias_ref, x_ref, o_ref):
    # Compute in f32 (mem-bound; VALU slack makes this free), single cast on
    # store.  OOB lanes/rows of partial edge blocks are masked on the store.
    x = x_ref[...].astype(jnp.float32)
    o_ref[...] = (x * scale_ref[...] + bias_ref[...]).astype(o_ref.dtype)


def distribution_uncertainty(x, key, *, p=0.5, eps=1e-6, factor=1.0,
                             training=True, apply_gate=True,
                             block_budget_bytes=None, vmem_limit_bytes=None):
    """x: (B, C, H, W) NCHW. Returns an array of the same shape/dtype."""
    if not training or not apply_gate:
        # TODO(synk): the host-side `np.random.random() > p` stochastic gate is
        # resolved at the wrapper level (static bool), not inside the kernel.
        return x

    B, C, H, W = x.shape
    HW = H * W
    BC = B * C

    kind = _device_kind()
    v7 = _is_v7(kind)
    if block_budget_bytes is None:
        # v7x has 64 MiB physical VMEM (vs 128 MiB on v5e/v6e): smaller blocks.
        block_budget_bytes = (4 << 20) if v7 else (8 << 20)
    if vmem_limit_bytes is None:
        vmem_limit_bytes = (40 << 20) if v7 else (64 << 20)

    itemsize = jnp.dtype(x.dtype).itemsize
    bc_tile, hw_tile = _pick_tiles(BC, HW, itemsize, block_budget_bytes)
    n_bc = pl.cdiv(BC, bc_tile)
    n_hw = pl.cdiv(HW, hw_tile)

    # No pad / no final slice: pass x as (B*C, HW) and let edge blocks be
    # partial (masked reads in kernel 1, masked writes everywhere).
    x2 = x.reshape(BC, HW)

    # -------- Pass 1: per-row stats (streaming Pallas reduction) --------
    stats = pl.pallas_call(
        functools.partial(_stats_kernel, hw=HW, hw_tile=hw_tile),
        out_shape=jax.ShapeDtypeStruct((BC, 2), jnp.float32),
        grid=(n_bc, n_hw),
        in_specs=[pl.BlockSpec((bc_tile, hw_tile), lambda i, j: (i, j))],
        out_specs=pl.BlockSpec((bc_tile, 2), lambda i, j: (i, 0)),
        compiler_params=pltpu.CompilerParams(
            dimension_semantics=_dim_semantics(kind, "arbitrary"),
            vmem_limit_bytes=vmem_limit_bytes),
    )(x2)

    # -------- Tiny (B, C) math in plain JAX --------
    s = stats[:, 0].reshape(B, C)
    sq = stats[:, 1].reshape(B, C)
    mean = s / HW
    var = (sq - HW * mean * mean) / (HW - 1)        # unbiased, like torch
    std = jnp.sqrt(var + eps)

    def sqrtvar(t):
        if B != 1:
            return jnp.sqrt(t.var(axis=0, ddof=1, keepdims=True) + eps)
        # torch path for a single batch element: sqrt(zeros + eps).
        return jnp.full((1, C), np.sqrt(eps), jnp.float32)

    k_mu, k_std = jax.random.split(key, 2)
    eps_mu = jax.random.normal(k_mu, (B, C), dtype=jnp.float32)
    eps_std = jax.random.normal(k_std, (B, C), dtype=jnp.float32)

    beta = mean + eps_mu * factor * sqrtvar(mean)
    gamma = std + eps_std * factor * sqrtvar(std)

    # Fused per-(B,C) affine:  out = (x - mean)/std * gamma + beta = x*scale + bias
    scale_bc = gamma / std
    bias_bc = beta - mean * scale_bc
    scale2 = scale_bc.reshape(BC, 1).astype(jnp.float32)
    bias2 = bias_bc.reshape(BC, 1).astype(jnp.float32)

    # -------- Pass 2: streaming FMA apply --------
    out2 = pl.pallas_call(
        _apply_kernel,
        out_shape=jax.ShapeDtypeStruct((BC, HW), x.dtype),
        grid=(n_bc, n_hw),
        in_specs=[pl.BlockSpec((bc_tile, 1), lambda i, j: (i, 0)),
                  pl.BlockSpec((bc_tile, 1), lambda i, j: (i, 0)),
                  pl.BlockSpec((bc_tile, hw_tile), lambda i, j: (i, j))],
        out_specs=pl.BlockSpec((bc_tile, hw_tile), lambda i, j: (i, j)),
        compiler_params=pltpu.CompilerParams(
            dimension_semantics=_dim_semantics(kind, "parallel"),
            vmem_limit_bytes=vmem_limit_bytes),
    )(scale2, bias2, x2)

    return out2.reshape(B, C, H, W)


# ----------------------------------------------------------------------------
# Pure-JAX reference mirroring the torch module (training, gate applied).
# ----------------------------------------------------------------------------
def _reference(x, key, *, eps=1e-6, factor=1.0):
    B, C, H, W = x.shape
    k_mu, k_std = jax.random.split(key, 2)
    eps_mu = jax.random.normal(k_mu, (B, C), dtype=jnp.float32)
    eps_std = jax.random.normal(k_std, (B, C), dtype=jnp.float32)

    xf = x.astype(jnp.float32)
    mean = xf.mean(axis=(2, 3))
    var = xf.var(axis=(2, 3), ddof=1)
    std = jnp.sqrt(var + eps)

    def sqrtvar(t):
        if B != 1:
            return jnp.sqrt(t.var(axis=0, ddof=1, keepdims=True) + eps)
        return jnp.full((1, C), np.sqrt(eps), jnp.float32)

    beta = mean + eps_mu * factor * sqrtvar(mean)
    gamma = std + eps_std * factor * sqrtvar(std)

    out = (xf - mean[:, :, None, None]) / std[:, :, None, None]
    out = out * gamma[:, :, None, None] + beta[:, :, None, None]
    return out.astype(x.dtype)


if __name__ == "__main__":
    key = jax.random.PRNGKey(0)
    k_x, k_noise, k_x2, k_noise2 = jax.random.split(key, 4)

    # Case 1: default byte-budgeted tiling (single block for this small shape).
    B, C, H, W = 2, 4, 16, 16
    x = jax.random.normal(k_x, (B, C, H, W), dtype=jnp.float32) * 2.0 + 0.5
    out = jax.block_until_ready(
        distribution_uncertainty(x, k_noise, p=0.5, eps=1e-6, factor=1.0,
                                 training=True, apply_gate=True))
    ref = jax.block_until_ready(_reference(x, k_noise, eps=1e-6, factor=1.0))
    assert out.shape == x.shape and out.dtype == x.dtype
    np.testing.assert_allclose(np.asarray(out), np.asarray(ref),
                               rtol=1e-4, atol=1e-5)

    # Case 2: force a tiny block budget to exercise partial edge blocks on both
    # axes and the masked HW tail in the stats reduction (no padding anywhere).
    B2, C2, H2, W2 = 3, 5, 13, 17
    x2 = jax.random.normal(k_x2, (B2, C2, H2, W2), dtype=jnp.float32) - 0.25
    out2 = jax.block_until_ready(
        distribution_uncertainty(x2, k_noise2, block_budget_bytes=4096))
    ref2 = jax.block_until_ready(_reference(x2, k_noise2))
    assert out2.shape == x2.shape and out2.dtype == x2.dtype
    np.testing.assert_allclose(np.asarray(out2), np.asarray(ref2),
                               rtol=1e-4, atol=1e-5)

    print("KERNEL_OK")
</pallas_src>

<mosaic_0001>
module attributes {stable_mosaic.version = 11 : i64} {
  func.func @_stats_kernel(%arg0: i32, %arg1: i32, %arg2: memref<8x256xf32, #tpu.memory_space<vmem>>, %arg3: memref<8x2xf32, #tpu.memory_space<vmem>>) attributes {dimension_semantics = [#tpu.dimension_semantics<parallel>, #tpu.dimension_semantics<arbitrary>], iteration_bounds = array<i64: 1, 1>, scalar_prefetch = 0 : i64, scratch_operands = 0 : i64, tpu.core_type = #tpu.core_type<tc>, window_params = [{transform_indices = @transform_0, window_bounds = array<i64: 8, 256>}, {transform_indices = @transform_1, window_bounds = array<i64: 8, 2>}]} {
    %c0_i32 = arith.constant 0 : i32
    %0 = arith.cmpi eq, %arg1, %c0_i32 : i32
    %1 = arith.extui %0 : i1 to i32
    %c0_i32_0 = arith.constant 0 : i32
    %2 = arith.cmpi ne, %1, %c0_i32_0 : i32
    scf.if %2 {
      %cst_10 = arith.constant 0.000000e+00 : f32
      %15 = vector.broadcast %cst_10 : f32 to vector<8x2xf32>
      %c0_11 = arith.constant 0 : index
      %c0_12 = arith.constant 0 : index
      %16 = vector.load %arg3[%c0_11, %c0_12] : memref<8x2xf32, #tpu.memory_space<vmem>>, vector<8x2xf32>
      tpu.vector_store %arg3[%c0_11, %c0_12], %15 {strides = array<i32>} : memref<8x2xf32, #tpu.memory_space<vmem>>, vector<8x2xf32>,
    } else {
    }
    %c0 = arith.constant 0 : index
    %c0_1 = arith.constant 0 : index
    %3 = vector.load %arg2[%c0, %c0_1] : memref<8x256xf32, #tpu.memory_space<vmem>>, vector<8x256xf32>
    %c0_2 = arith.constant 0 : index
    %c0_3 = arith.constant 0 : index
    %4 = vector.load %arg3[%c0_2, %c0_3] : memref<8x2xf32, #tpu.memory_space<vmem>>, vector<8x1xf32>
    %cst = arith.constant dense<0.000000e+00> : vector<8xf32>
    %5 = vector.multi_reduction <add>, %3, %cst [1] : vector<8x256xf32> to vector<8xf32>
    %6 = vector.shape_cast %5 : vector<8xf32> to vector<8x1xf32>
    %7 = arith.addf %4, %6 : vector<8x1xf32>
    %c0_4 = arith.constant 0 : index
    %c0_5 = arith.constant 0 : index
    %8 = vector.load %arg3[%c0_4, %c0_5] : memref<8x2xf32, #tpu.memory_space<vmem>>, vector<8x1xf32>
    tpu.vector_store %arg3[%c0_4, %c0_5], %7 {strides = array<i32>} : memref<8x2xf32, #tpu.memory_space<vmem>>, vector<8x1xf32>,
    %c0_6 = arith.constant 0 : index
    %c1 = arith.constant 1 : index
    %9 = vector.load %arg3[%c0_6, %c1] : memref<8x2xf32, #tpu.memory_space<vmem>>, vector<8x1xf32>
    %10 = arith.mulf %3, %3 : vector<8x256xf32>
    %cst_7 = arith.constant dense<0.000000e+00> : vector<8xf32>
    %11 = vector.multi_reduction <add>, %10, %cst_7 [1] : vector<8x256xf32> to vector<8xf32>
    %12 = vector.shape_cast %11 : vector<8xf32> to vector<8x1xf32>
    %13 = arith.addf %9, %12 : vector<8x1xf32>
    %c0_8 = arith.constant 0 : index
    %c1_9 = arith.constant 1 : index
    %14 = vector.load %arg3[%c0_8, %c1_9] : memref<8x2xf32, #tpu.memory_space<vmem>>, vector<8x1xf32>
    tpu.vector_store %arg3[%c0_8, %c1_9], %13 {strides = array<i32>} : memref<8x2xf32, #tpu.memory_space<vmem>>, vector<8x1xf32>,
    return
  }
  func.func @transform_0(%arg0: i32, %arg1: i32) -> (i32, i32) {
    %c0_i32 = arith.constant 0 : i32
    return %arg0, %arg1 : i32, i32
  }
  func.func @transform_1(%arg0: i32, %arg1: i32) -> (i32, i32) {
    %c0_i32 = arith.constant 0 : i32
    %c0_i32_0 = arith.constant 0 : i32
    return %arg0, %c0_i32 : i32, i32
  }
}

</mosaic_0001>

<llo_original>
// kernel: tpu_custom_call.1
$region0: #{tpu_custom_call.1}
  #allocation0 [shape = 'u32[]', space=smem, size = 0x4, offset = 0x4, fixed_abs, tag = 'smem constant byte address 0x4 - core index']
  #allocation1 [shape = 'u32[144,128]{1,0:T(1,128)}', space=vmem, size = 0x12000, scoped, tag = 'internal scratch']
  %s0 = inlined_call_operand.hbm [shape: f32[8,256], index: 0, kind: input, shape index: {}]
  %s1 = inlined_call_operand.hbm [shape: f32[8,2], index: 1, kind: output, shape index: {}]
  %s2 = sld [smem:[#allocation0]]
  $region22: #{tpu_custom_call.1} parent=0
    _
  %s4 = ssub.s32 1, %s2
  %s5 = scalar_select 0, %s4, %s2
  $region1: #{tpu_custom_call.1} parent=0
    #allocation2 [shape = 'u8[8192]{0}', space=vmem, size = 0x2000, scoped, tag = 'input window, operand 0, single buffered']
    #allocation3 [shape = 's32[1]{0}', space=sflag, size = 0x4, scoped, tag = 'scoped memory for tpu_custom_call.1']
    #allocation4 [shape = 's32[1]{0}', space=sflag, size = 0x4, scoped, tag = 'scoped memory for tpu_custom_call.1']
    #allocation5 [shape = 'u8[4096]{0}', space=vmem, size = 0x1000, scoped, tag = 'output window, operand 0, single buffered']
    %6 = vsyncpa [#allocation3], 0
    %7 = vsyncpa [#allocation4], 0
    // Predicated region
    $region2: #{tpu_custom_call.1} parent=1 // pred_check
      _
    $region3: #{tpu_custom_call.1} parent=1 // pred_check_branch
      %9 = sbr.rel (0) target = $region5
    $region4: #{tpu_custom_call.1} parent=1 // pred_region
      %s11 = ssub.s32 256, 256
      %12 = vsyncadd [#allocation3], %s11
      %s14 = sshll.u32 [#allocation2], 4
      %s15 = int_to_ptr.vmem [resolvable:$true] %s14
      %17 = dma.hbm_to_vmem [thread:$0]  %s0, 256, %s15, [#allocation3]
    $region5: #{tpu_custom_call.1} parent=1 // pred_fallthru
      _
    // Predicated region
    $region6: #{tpu_custom_call.1} parent=1 // pred_check
      _
    $region7: #{tpu_custom_call.1} parent=1 // pred_check_branch
      %19 = sbr.rel (0) target = $region9
    $region8: #{tpu_custom_call.1} parent=1 // pred_region
      %20 = dma.done [#allocation3], 256
    $region9: #{tpu_custom_call.1} parent=1 // pred_fallthru
      _
    %p21 = scmp.eq.s32.totalorder 0, 0
    // Predicated region
    $region10: #{tpu_custom_call.1} parent=1 // pred_check
      %p22 = pneg %p21
    $region11: #{tpu_custom_call.1} parent=1 // pred_check_branch
      %24 = sbr.rel (%p22) target = $region13
    $region12: #{tpu_custom_call.1} parent=1 // pred_region
      %vm25 = vcmask 15360
      %26 = vst.msk [vmem:[#allocation5] sm:$0xff] %vm25, 0.0
    $region13: #{tpu_custom_call.1} parent=1 // pred_fallthru
      _
    %v27 = vld [vmem:[#allocation2] sm:$0xff]
    %v28 = vld [vmem:[#allocation2 + $0x8] sm:$0xff]
    %v29 = vld [vmem:[#allocation5] sm:$0xff]
    %v30 = vadd.f32 %v27, %v28
    %31 = vadd.xlane.f32.xlu0 %v30
    %v32 = vpop.xlane.xlu0 %31
    %v33 = vadd.f32 %v29, %v32
    %vm34 = vcmask 7168
    %35 = vst.msk [vmem:[#allocation5] sm:$0xff] %vm34, %v33
    %v36 = vld [vmem:[#allocation5] sm:$0xff]
    %v37 = vmul.f32 %v27, %v27
    %v38 = vmul.f32 %v28, %v28
    %v39 = vadd.f32 %v37, %v38
    %40 = vadd.xlane.f32.xlu0 %v39
    %v41 = vpop.xlane.xlu0 %40
    %v42 = vadd.f32 %v36, %v41
    %vm43 = vcmask 15368
    %44 = vst.msk [vmem:[#allocation5] sm:$0xff] %vm43, %v42
    // Predicated region
    $region14: #{tpu_custom_call.1} parent=1 // pred_check
      _
    $region15: #{tpu_custom_call.1} parent=1 // pred_check_branch
      %46 = sbr.rel (0) target = $region17
    $region16: #{tpu_custom_call.1} parent=1 // pred_region
      %s48 = ssub.s32 128, 128
      %49 = vsyncadd [#allocation4], %s48
      %s51 = sshll.u32 [#allocation5], 4
      %s52 = int_to_ptr.vmem [resolvable:$true] %s51
      %54 = dma.vmem_to_hbm [thread:$0]  %s52, 128, %s1, [#allocation4]
    $region17: #{tpu_custom_call.1} parent=1 // pred_fallthru
      _
    // Predicated region
    $region18: #{tpu_custom_call.1} parent=1 // pred_check
      _
    $region19: #{tpu_custom_call.1} parent=1 // pred_check_branch
      %56 = sbr.rel (0) target = $region21
    $region20: #{tpu_custom_call.1} parent=1 // pred_region
      %57 = dma.done [#allocation4], 128
    $region21: #{tpu_custom_call.1} parent=1 // pred_fallthru
      _
    %58 = vsyncpa [#allocation3], 1
    %59 = vsyncpa [#allocation4], 1

</llo_original>
